<compile_context>
chip_gen: v7x
topology: tpu7x:2x2x1
jax: 0.10.0
libtpu: 0.0.40
codegen_flags: <defaults>
</compile_context>

<pallas_src>
import math

import jax
import jax.numpy as jnp
from jax import lax
from jax.experimental import pallas as pl
from jax.experimental.pallas import tpu as pltpu


def _conv_relu_pool_kernel(p_ref, w_ref, b_ref, o_ref):
    """One grid step = Bt images.

    p_ref: (4, 25, Bt*144) bf16 im2col patches. Leading axis j = 2*dh + dw is
           the position inside the 2x2 pool window; k = 5*ki + kj; lane index
           n = b_local*144 + 12*ph + pw (pooled output coordinates).
    w_ref: (16, 25) bf16 conv weights, k = 5*ki + kj.
    b_ref: (16, 1)  f32 conv bias.
    o_ref: (16, Bt*144) f32 pooled output, column n = b_local*144 + 12*ph + pw.
    """
    w = w_ref[...]
    # Four lane-dense MXU matmuls (one per 2x2 pool-window member), f32 accum.
    m = jnp.dot(w, p_ref[0], preferred_element_type=jnp.float32)
    m = jnp.maximum(m, jnp.dot(w, p_ref[1], preferred_element_type=jnp.float32))
    m = jnp.maximum(m, jnp.dot(w, p_ref[2], preferred_element_type=jnp.float32))
    m = jnp.maximum(m, jnp.dot(w, p_ref[3], preferred_element_type=jnp.float32))
    # max_j(relu(m_j + b)) == relu(max_j(m_j) + b): bias/ReLU once, post-pool.
    o_ref[...] = jnp.maximum(m + b_ref[...], 0.0).astype(o_ref.dtype)


def _choose_block_batch(B):
    """Images per grid step. Must be a multiple of 8 so the block lane width
    Bt*144 is a multiple of 128 (unmasked stores, aligned pool maxes). Bigger
    batches get bigger blocks to amortize per-step overhead while keeping
    >= 2 grid steps so both of v7x's TensorCores get work."""
    if B >= 256:
        return 64
    if B >= 64:
        return 32
    return 8


def cnn1_forward(x, conv_w, conv_b):
    """x: anything reshapeable to (-1, 1, 28, 28); conv_w: (16,1,5,5); conv_b: (16,)."""
    x2 = x.reshape(-1, 28, 28).astype(jnp.float32)
    B = x2.shape[0]
    Bt = _choose_block_batch(B)
    B_pad = ((B + Bt - 1) // Bt) * Bt
    if B_pad != B:
        x2 = jnp.pad(x2, ((0, B_pad - B), (0, 0), (0, 0)))

    # --- im2col (pure gather/reshape, zero FLOPs, done once in the wrapper) ---
    # cols[b, 5*ki+kj, oh, ow] = x2[b, oh+ki, ow+kj]     (valid conv, 24x24 out)
    cols = jnp.stack(
        [x2[:, ki:ki + 24, kj:kj + 24] for ki in range(5) for kj in range(5)],
        axis=1,
    )                                                      # (B_pad, 25, 24, 24)
    # Group conv positions by 2x2 pool-window member and fold batch into lanes:
    #   patches[2*dh+dw, k, b*144 + 12*ph + pw] = x2[b, 2*ph+dh+ki, 2*pw+dw+kj]
    g = cols.reshape(B_pad, 25, 12, 2, 12, 2)              # (b, k, ph, dh, pw, dw)
    patches = (
        g.transpose(3, 5, 1, 0, 2, 4)                      # (dh, dw, k, b, ph, pw)
        .reshape(4, 25, B_pad * 144)
        .astype(jnp.bfloat16)                              # halve HBM read bytes
    )

    w2 = conv_w.reshape(16, 25).astype(jnp.bfloat16)
    b2 = conv_b.reshape(16, 1).astype(jnp.float32)

    lanes = Bt * 144                                       # multiple of 128
    out = pl.pallas_call(
        _conv_relu_pool_kernel,
        out_shape=jax.ShapeDtypeStruct((16, B_pad * 144), jnp.float32),
        grid=(B_pad // Bt,),
        in_specs=[
            pl.BlockSpec((4, 25, lanes), lambda i: (0, 0, i)),
            pl.BlockSpec((16, 25), lambda i: (0, 0)),
            pl.BlockSpec((16, 1), lambda i: (0, 0)),
        ],
        out_specs=pl.BlockSpec((16, lanes), lambda i: (0, i)),
        compiler_params=pltpu.CompilerParams(
            dimension_semantics=("parallel",)),
    )(patches, w2, b2)

    # column n = b*144 + 12*ph + pw  ->  (B, 16, 12, 12) exactly as PyTorch.
    out = out.reshape(16, B_pad, 12, 12)[:, :B]
    return jnp.transpose(out, (1, 0, 2, 3))


def reference_forward(x, conv_w, conv_b, *, bf16_inputs=False):
    """Pure-JAX reference mirroring the PyTorch module. With bf16_inputs=True
    the conv inputs are rounded to bf16 (like the kernel) but accumulated in
    f32, isolating accumulation-order differences from input rounding."""
    x2 = x.reshape(-1, 1, 28, 28).astype(jnp.float32)
    w = conv_w.astype(jnp.float32)
    if bf16_inputs:
        x2 = x2.astype(jnp.bfloat16).astype(jnp.float32)
        w = w.astype(jnp.bfloat16).astype(jnp.float32)
    conv = lax.conv_general_dilated(
        x2, w, window_strides=(1, 1), padding="VALID",
        dimension_numbers=("NCHW", "OIHW", "NCHW"),
        precision=lax.Precision.HIGHEST)
    conv = jnp.maximum(conv + conv_b.reshape(1, 16, 1, 1), 0.0)
    B = conv.shape[0]
    return conv.reshape(B, 16, 12, 2, 12, 2).max(axis=(3, 5))


if __name__ == "__main__":
    key = jax.random.PRNGKey(0)
    kx, kw, kb = jax.random.split(key, 3)

    B = 2
    x = jax.random.normal(kx, (B, 1, 28, 28), jnp.float32)

    # nn.Conv2d default init bounds: uniform(+-1/sqrt(fan_in)), fan_in = 1*5*5.
    fan_in = 1 * 5 * 5
    bound = 1.0 / math.sqrt(fan_in)
    conv_w = jax.random.uniform(kw, (16, 1, 5, 5), jnp.float32, -bound, bound)
    conv_b = jax.random.uniform(kb, (16,), jnp.float32, -bound, bound)

    out = cnn1_forward(x, conv_w, conv_b)
    out = jax.block_until_ready(out)
    assert out.shape == (B, 16, 12, 12), out.shape

    # Tight check vs a reference fed the same bf16-rounded inputs (f32 accum).
    ref_bf16 = reference_forward(x, conv_w, conv_b, bf16_inputs=True)
    assert jnp.allclose(out, ref_bf16, atol=1e-4, rtol=1e-4), (
        float(jnp.abs(out - ref_bf16).max()))
    # Loose check vs exact f32 module semantics (only bf16 input rounding).
    ref_f32 = reference_forward(x, conv_w, conv_b)
    assert jnp.allclose(out, ref_f32, atol=1e-1, rtol=1e-1), (
        float(jnp.abs(out - ref_f32).max()))

    print("KERNEL_OK")
</pallas_src>

<mosaic_0001>
module attributes {stable_mosaic.version = 11 : i64} {
  func.func @_conv_relu_pool_kernel(%arg0: i32, %arg1: memref<4x25x1152xbf16, #tpu.memory_space<vmem>>, %arg2: memref<16x25xbf16, #tpu.memory_space<vmem>>, %arg3: memref<16x1xf32, #tpu.memory_space<vmem>>, %arg4: memref<16x1152xf32, #tpu.memory_space<vmem>>) attributes {dimension_semantics = [#tpu.dimension_semantics<parallel>], iteration_bounds = array<i64: 1>, scalar_prefetch = 0 : i64, scratch_operands = 0 : i64, tpu.core_type = #tpu.core_type<tc>, window_params = [{transform_indices = @transform_0, window_bounds = array<i64: 4, 25, 1152>}, {pipeline_mode = #tpu.pipeline_mode<synchronous>, transform_indices = @transform_1, window_bounds = array<i64: 16, 25>}, {pipeline_mode = #tpu.pipeline_mode<synchronous>, transform_indices = @transform_2, window_bounds = array<i64: 16, 1>}, {transform_indices = @transform_3, window_bounds = array<i64: 16, 1152>}]} {
    %c0 = arith.constant 0 : index
    %c0_0 = arith.constant 0 : index
    %0 = vector.load %arg2[%c0, %c0_0] : memref<16x25xbf16, #tpu.memory_space<vmem>>, vector<16x25xbf16>
    %c0_1 = arith.constant 0 : index
    %c0_2 = arith.constant 0 : index
    %c0_3 = arith.constant 0 : index
    %1 = vector.load %arg1[%c0_1, %c0_2, %c0_3] : memref<4x25x1152xbf16, #tpu.memory_space<vmem>>, vector<1x25x1152xbf16>
    %2 = vector.shape_cast %1 : vector<1x25x1152xbf16> to vector<25x1152xbf16>
    %cst = arith.constant dense<0.000000e+00> : vector<16x1152xf32>
    %3 = tpu.matmul %0, %2, %cst {dimension_numbers = #tpu.dot_dimension_numbers<[1], [0], [0], [1], [0, 0, 1, 1], [], []>} : vector<16x25xbf16>, vector<25x1152xbf16>, vector<16x1152xf32> -> vector<16x1152xf32>
    %c1 = arith.constant 1 : index
    %c0_4 = arith.constant 0 : index
    %c0_5 = arith.constant 0 : index
    %4 = vector.load %arg1[%c1, %c0_4, %c0_5] : memref<4x25x1152xbf16, #tpu.memory_space<vmem>>, vector<1x25x1152xbf16>
    %5 = vector.shape_cast %4 : vector<1x25x1152xbf16> to vector<25x1152xbf16>
    %cst_6 = arith.constant dense<0.000000e+00> : vector<16x1152xf32>
    %6 = tpu.matmul %0, %5, %cst_6 {dimension_numbers = #tpu.dot_dimension_numbers<[1], [0], [0], [1], [0, 0, 1, 1], [], []>} : vector<16x25xbf16>, vector<25x1152xbf16>, vector<16x1152xf32> -> vector<16x1152xf32>
    %7 = arith.maximumf %3, %6 : vector<16x1152xf32>
    %c2 = arith.constant 2 : index
    %c0_7 = arith.constant 0 : index
    %c0_8 = arith.constant 0 : index
    %8 = vector.load %arg1[%c2, %c0_7, %c0_8] : memref<4x25x1152xbf16, #tpu.memory_space<vmem>>, vector<1x25x1152xbf16>
    %9 = vector.shape_cast %8 : vector<1x25x1152xbf16> to vector<25x1152xbf16>
    %cst_9 = arith.constant dense<0.000000e+00> : vector<16x1152xf32>
    %10 = tpu.matmul %0, %9, %cst_9 {dimension_numbers = #tpu.dot_dimension_numbers<[1], [0], [0], [1], [0, 0, 1, 1], [], []>} : vector<16x25xbf16>, vector<25x1152xbf16>, vector<16x1152xf32> -> vector<16x1152xf32>
    %11 = arith.maximumf %7, %10 : vector<16x1152xf32>
    %c3 = arith.constant 3 : index
    %c0_10 = arith.constant 0 : index
    %c0_11 = arith.constant 0 : index
    %12 = vector.load %arg1[%c3, %c0_10, %c0_11] : memref<4x25x1152xbf16, #tpu.memory_space<vmem>>, vector<1x25x1152xbf16>
    %13 = vector.shape_cast %12 : vector<1x25x1152xbf16> to vector<25x1152xbf16>
    %cst_12 = arith.constant dense<0.000000e+00> : vector<16x1152xf32>
    %14 = tpu.matmul %0, %13, %cst_12 {dimension_numbers = #tpu.dot_dimension_numbers<[1], [0], [0], [1], [0, 0, 1, 1], [], []>} : vector<16x25xbf16>, vector<25x1152xbf16>, vector<16x1152xf32> -> vector<16x1152xf32>
    %15 = arith.maximumf %11, %14 : vector<16x1152xf32>
    %c0_13 = arith.constant 0 : index
    %c0_14 = arith.constant 0 : index
    %16 = vector.load %arg3[%c0_13, %c0_14] : memref<16x1xf32, #tpu.memory_space<vmem>>, vector<16x1xf32>
    %17 = vector.broadcast %16 : vector<16x1xf32> to vector<16x1152xf32>
    %18 = arith.addf %15, %17 : vector<16x1152xf32>
    %cst_15 = arith.constant 0.000000e+00 : f32
    %19 = vector.broadcast %cst_15 : f32 to vector<16x1152xf32>
    %20 = arith.maximumf %18, %19 : vector<16x1152xf32>
    %c0_16 = arith.constant 0 : index
    %c0_17 = arith.constant 0 : index
    %21 = vector.load %arg4[%c0_16, %c0_17] : memref<16x1152xf32, #tpu.memory_space<vmem>>, vector<16x1152xf32>
    tpu.vector_store %arg4[%c0_16, %c0_17], %20 {strides = array<i32>} : memref<16x1152xf32, #tpu.memory_space<vmem>>, vector<16x1152xf32>,
    return
  }
  func.func @transform_0(%arg0: i32) -> (i32, i32, i32) {
    %c0_i32 = arith.constant 0 : i32
    %c0_i32_0 = arith.constant 0 : i32
    %c0_i32_1 = arith.constant 0 : i32
    return %c0_i32, %c0_i32_0, %arg0 : i32, i32, i32
  }
  func.func @transform_1(%arg0: i32) -> (i32, i32) {
    %c0_i32 = arith.constant 0 : i32
    %c0_i32_0 = arith.constant 0 : i32
    %c0_i32_1 = arith.constant 0 : i32
    return %c0_i32, %c0_i32_0 : i32, i32
  }
  func.func @transform_2(%arg0: i32) -> (i32, i32) {
    %c0_i32 = arith.constant 0 : i32
    %c0_i32_0 = arith.constant 0 : i32
    %c0_i32_1 = arith.constant 0 : i32
    return %c0_i32, %c0_i32_0 : i32, i32
  }
  func.func @transform_3(%arg0: i32) -> (i32, i32) {
    %c0_i32 = arith.constant 0 : i32
    %c0_i32_0 = arith.constant 0 : i32
    return %c0_i32, %arg0 : i32, i32
  }
}

</mosaic_0001>

<llo_original>
// kernel: tpu_custom_call.1
$region0: #{tpu_custom_call.1}
  #allocation0 [shape = 'u32[]', space=smem, size = 0x4, offset = 0x4, fixed_abs, tag = 'smem constant byte address 0x4 - core index']
  #allocation1 [shape = 'u32[144,128]{1,0:T(1,128)}', space=vmem, size = 0x12000, scoped, tag = 'internal scratch']
  %s0 = inlined_call_operand.vmem [shape: bf16[4,25,1152], index: 0, kind: input, shape index: {}]
  %s1 = inlined_call_operand.vmem [shape: bf16[16,25], index: 1, kind: input, shape index: {}]
  %s2 = inlined_call_operand.vmem [shape: f32[16,1], index: 2, kind: input, shape index: {}]
  %s3 = inlined_call_operand.hbm [shape: f32[16,1152], index: 3, kind: output, shape index: {}]
  %s4 = sld [smem:[#allocation0]]
  $region22: #{tpu_custom_call.1} parent=0
    _
  %s6 = ssub.s32 1, %s4
  %s7 = scalar_select 0, %s6, %s4
  $region1: #{tpu_custom_call.1} parent=0
    #allocation2 [shape = 'u8[73728]{0}', space=vmem, size = 0x12000, scoped, tag = 'output window, operand 0, single buffered']
    #allocation3 [shape = 's32[1]{0}', space=sflag, size = 0x4, scoped, tag = 'scoped memory for tpu_custom_call.1']
    %8 = vsyncpa [#allocation3], 0
    // Predicated region
    $region2: #{tpu_custom_call.1} parent=1 // pred_check
      _
    $region3: #{tpu_custom_call.1} parent=1 // pred_check_branch
      %10 = sbr.rel (0) target = $region5
    $region4: #{tpu_custom_call.1} parent=1 // pred_region
      _
    $region5: #{tpu_custom_call.1} parent=1 // pred_fallthru
      _
    // Predicated region
    $region6: #{tpu_custom_call.1} parent=1 // pred_check
      _
    $region7: #{tpu_custom_call.1} parent=1 // pred_check_branch
      %12 = sbr.rel (0) target = $region9
    $region8: #{tpu_custom_call.1} parent=1 // pred_region
      _
    $region9: #{tpu_custom_call.1} parent=1 // pred_fallthru
      _
    // Predicated region
    $region10: #{tpu_custom_call.1} parent=1 // pred_check
      _
    $region11: #{tpu_custom_call.1} parent=1 // pred_check_branch
      %14 = sbr.rel (0) target = $region13
    $region12: #{tpu_custom_call.1} parent=1 // pred_region
      _
    $region13: #{tpu_custom_call.1} parent=1 // pred_fallthru
      _
    %v16 = vld [vmem:[%s1] sm:$0xf]
    %v17 = vld [vmem:[%s1 + $0x4] sm:$0xf]
    %v18 = vld [vmem:[%s0] sm:$0xff]
    %v19 = vld [vmem:[%s0 + $0x8] sm:$0xff]
    %v20 = vld [vmem:[%s0 + $0x10] sm:$0xff]
    %v21 = vld [vmem:[%s0 + $0x18] sm:$0xff]
    %v22 = vld [vmem:[%s0 + $0x20] sm:$0xf]
    %v23 = vld [vmem:[%s0 + $0x24] sm:$0xff]
    %v24 = vld [vmem:[%s0 + $0x2c] sm:$0xff]
    %v25 = vld [vmem:[%s0 + $0x34] sm:$0xff]
    %v26 = vld [vmem:[%s0 + $0x3c] sm:$0xff]
    %v27 = vld [vmem:[%s0 + $0x44] sm:$0xf]
    %v28 = vld [vmem:[%s0 + $0x48] sm:$0xff]
    %v29 = vld [vmem:[%s0 + $0x50] sm:$0xff]
    %v30 = vld [vmem:[%s0 + $0x58] sm:$0xff]
    %v31 = vld [vmem:[%s0 + $0x60] sm:$0xff]
    %v32 = vld [vmem:[%s0 + $0x68] sm:$0xf]
    %v33 = vld [vmem:[%s0 + $0x6c] sm:$0x11]
    %v34 = vld [vmem:[%s0 + $0x74] sm:$0x11]
    %v35 = vld [vmem:[%s0 + $0x7c] sm:$0x11]
    %v36 = vld [vmem:[%s0 + $0x84] sm:$0x11]
    %v37 = vld [vmem:[%s0 + $0x8c] sm:$0x1]
    %v40 = vunpack.c.l.b16 %v16
    %v41 = vunpack.c.l.b16 %v17
    %v42 = vpack.c.b16 %v41, %v40
    %v63 = vunpack.c.l.b16 %v18
    %v64 = vunpack.c.h.b16 %v18
    %v65 = vunpack.c.l.b16 %v19
    %v66 = vunpack.c.h.b16 %v19
    %v67 = vunpack.c.l.b16 %v20
    %v68 = vunpack.c.h.b16 %v20
    %v69 = vunpack.c.l.b16 %v21
    %v70 = vunpack.c.h.b16 %v21
    %v71 = vunpack.c.l.b16 %v22
    %v72 = vunpack.c.l.b16 %v23
    %v73 = vunpack.c.h.b16 %v23
    %v74 = vunpack.c.l.b16 %v24
    %v75 = vunpack.c.h.b16 %v24
    %v76 = vunpack.c.l.b16 %v25
    %v77 = vunpack.c.h.b16 %v25
    %v78 = vunpack.c.l.b16 %v26
    %v79 = vunpack.c.h.b16 %v26
    %v80 = vunpack.c.l.b16 %v27
    %v81 = vunpack.c.l.b16 %v28
    %v82 = vunpack.c.h.b16 %v28
    %v83 = vunpack.c.l.b16 %v29
    %v84 = vunpack.c.h.b16 %v29
    %v85 = vunpack.c.l.b16 %v30
    %v86 = vunpack.c.h.b16 %v30
    %v87 = vunpack.c.l.b16 %v31
    %v88 = vunpack.c.h.b16 %v31
    %v89 = vunpack.c.l.b16 %v32
    %v90 = vunpack.c.l.b16 %v33
    %v91 = vunpack.c.h.b16 %v33
    %v92 = vunpack.c.l.b16 %v34
    %v93 = vunpack.c.h.b16 %v34
    %v94 = vunpack.c.l.b16 %v35
    %v95 = vunpack.c.h.b16 %v35
    %v96 = vunpack.c.l.b16 %v36
    %v97 = vunpack.c.h.b16 %v36
    %v98 = vunpack.c.l.b16 %v37
    %v99 = vpack.c.b16 %v72, %v63
    %v100 = vpack.c.b16 %v73, %v64
    %v101 = vpack.c.b16 %v74, %v65
    %v102 = vpack.c.b16 %v75, %v66
    %v103 = vpack.c.b16 %v76, %v67
    %v104 = vpack.c.b16 %v77, %v68
    %v105 = vpack.c.b16 %v78, %v69
    %v106 = vpack.c.b16 %v79, %v70
    %v107 = vpack.c.b16 %v80, %v71
    %v108 = vpack.c.b16 %v90, %v81
    %v109 = vpack.c.b16 %v91, %v82
    %v110 = vpack.c.b16 %v92, %v83
    %v111 = vpack.c.b16 %v93, %v84
    %v112 = vpack.c.b16 %v94, %v85
    %v113 = vpack.c.b16 %v95, %v86
    %v114 = vpack.c.b16 %v96, %v87
    %v115 = vpack.c.b16 %v97, %v88
    %v116 = vpack.c.b16 %v98, %v89
    %vm126 = vcmask 203776
    %v128 = vsel %vm126, %v42, 0
    %vm130 = vcmask 1043456
    %vm131 = vcmask 1044480
    %v132 = vsel %vm130, 4294967295, 65535
    %v133 = vsel %vm131, %v132, 0
    %v135 = vand.u32 %v108, %v133
    %v138 = vand.u32 %v109, %v133
    %v141 = vand.u32 %v110, %v133
    %v144 = vand.u32 %v111, %v133
    %v147 = vand.u32 %v112, %v133
    %v150 = vand.u32 %v113, %v133
    %v153 = vand.u32 %v114, %v133
    %v156 = vand.u32 %v115, %v133
    %v159 = vand.u32 %v116, %v133
    %161 = vmatprep.subr.bf16.mxu0 %v100
    %162 = vmatpush1.bf16.msra.mxu0 %v99
    %163 = vmatprep.subr.bf16.mxu0 %v138
    %164 = vmatpush1.bf16.msra.mxu0 %v135
    %165 = vmatprep.subr.bf16.mxu0 0
    %166 = vmatpush1.bf16.msra.mxu0 0
    %167 = vmatprep.subr.bf16.mxu0 0
    %168 = vmatpush1.bf16.msra.mxu0 0
    %169 = vmatprep.subr.bf16.mxu0 0
    %170 = vmatpush1.bf16.msra.mxu0 0
    %171 = vmatprep.subr.bf16.mxu0 0
    %172 = vmatpush1.bf16.msra.mxu0 0
    %173 = vmatprep.subr.bf16.mxu0 0
    %174 = vmatpush1.bf16.msra.mxu0 0
    %175 = vmatprep.subr.bf16.mxu0 0
    %176 = vmatpush1.bf16.msra.mxu0 0
    %177 = vmatprep.subr.bf16.mxu0 0
    %178 = vmatpush1.bf16.msra.mxu0 0
    %179 = vmatprep.subr.bf16.mxu0 0
    %180 = vmatpush1.bf16.msra.mxu0 0
    %181 = vmatprep.subr.bf16.mxu0 0
    %182 = vmatpush1.bf16.msra.mxu0 0
    %183 = vmatprep.subr.bf16.mxu0 0
    %184 = vmatpush1.bf16.msra.mxu0 0
    %185 = vmatprep.subr.bf16.mxu0 0
    %186 = vmatpush1.bf16.msra.mxu0 0
    %187 = vmatprep.subr.bf16.mxu0 0
    %188 = vmatpush1.bf16.msra.mxu0 0
    %189 = vmatprep.subr.bf16.mxu0 0
    %190 = vmatpush1.bf16.msra.mxu0 0
    %191 = vmatprep.subr.bf16.mxu0 0
    %192 = vmatpush1.bf16.msra.mxu0 0
    %193 = vmatprep.mubr.bf16.mxu0 0
    %194 = vmatmul.mubr.bf16.gmra.mrb[0].mxu0 %v128
    %v195 = vpop.f32.mrb[0].mxu0
    %v196 = vadd.f32 0.0, %v195
    %v197 = vpop.f32.mrb[0].mxu0
    %v198 = vadd.f32 0.0, %v197
    %v199 = vpop.f32.mrb[0].mxu0
    %v200 = vadd.f32 0.0, %v199
    %v201 = vpop.f32.mrb[0].mxu0
    %v202 = vadd.f32 0.0, %v201
    %203 = vdwg.mxu0
    %204 = vmatprep.subr.bf16.mxu0 %v102
    %205 = vmatpush1.bf16.msra.mxu0 %v101
    %206 = vmatprep.subr.bf16.mxu0 %v144
    %207 = vmatpush1.bf16.msra.mxu0 %v141
    %208 = vmatprep.subr.bf16.mxu0 0
    %209 = vmatpush1.bf16.msra.mxu0 0
    %210 = vmatprep.subr.bf16.mxu0 0
    %211 = vmatpush1.bf16.msra.mxu0 0
    %212 = vmatprep.subr.bf16.mxu0 0
    %213 = vmatpush1.bf16.msra.mxu0 0
    %214 = vmatprep.subr.bf16.mxu0 0
    %215 = vmatpush1.bf16.msra.mxu0 0
    %216 = vmatprep.subr.bf16.mxu0 0
    %217 = vmatpush1.bf16.msra.mxu0 0
    %218 = vmatprep.subr.bf16.mxu0 0
    %219 = vmatpush1.bf16.msra.mxu0 0
    %220 = vmatprep.subr.bf16.mxu0 0
    %221 = vmatpush1.bf16.msra.mxu0 0
    %222 = vmatprep.subr.bf16.mxu0 0
    %223 = vmatpush1.bf16.msra.mxu0 0
    %224 = vmatprep.subr.bf16.mxu0 0
    %225 = vmatpush1.bf16.msra.mxu0 0
    %226 = vmatprep.subr.bf16.mxu0 0
    %227 = vmatpush1.bf16.msra.mxu0 0
    %228 = vmatprep.subr.bf16.mxu0 0
    %229 = vmatpush1.bf16.msra.mxu0 0
    %230 = vmatprep.subr.bf16.mxu0 0
    %231 = vmatpush1.bf16.msra.mxu0 0
    %232 = vmatprep.subr.bf16.mxu0 0
    %233 = vmatpush1.bf16.msra.mxu0 0
    %234 = vmatprep.subr.bf16.mxu0 0
    %235 = vmatpush1.bf16.msra.mxu0 0
    %236 = vmatprep.mubr.bf16.mxu0 0
    %237 = vmatmul.mubr.bf16.gmra.mrb[0].mxu0 %v128
    %v238 = vpop.f32.mrb[0].mxu0
    %v239 = vadd.f32 0.0, %v238
    %v240 = vpop.f32.mrb[0].mxu0
    %v241 = vadd.f32 0.0, %v240
    %v242 = vpop.f32.mrb[0].mxu0
    %v243 = vadd.f32 0.0, %v242
    %v244 = vpop.f32.mrb[0].mxu0
    %v245 = vadd.f32 0.0, %v244
    %246 = vdwg.mxu0
    %247 = vmatprep.subr.bf16.mxu0 %v104
    %248 = vmatpush1.bf16.msra.mxu0 %v103
    %249 = vmatprep.subr.bf16.mxu0 %v150
    %250 = vmatpush1.bf16.msra.mxu0 %v147
    %251 = vmatprep.subr.bf16.mxu0 0
    %252 = vmatpush1.bf16.msra.mxu0 0
    %253 = vmatprep.subr.bf16.mxu0 0
    %254 = vmatpush1.bf16.msra.mxu0 0
    %255 = vmatprep.subr.bf16.mxu0 0
    %256 = vmatpush1.bf16.msra.mxu0 0
    %257 = vmatprep.subr.bf16.mxu0 0
    %258 = vmatpush1.bf16.msra.mxu0 0
    %259 = vmatprep.subr.bf16.mxu0 0
    %260 = vmatpush1.bf16.msra.mxu0 0
    %261 = vmatprep.subr.bf16.mxu0 0
    %262 = vmatpush1.bf16.msra.mxu0 0
    %263 = vmatprep.subr.bf16.mxu0 0
    %264 = vmatpush1.bf16.msra.mxu0 0
    %265 = vmatprep.subr.bf16.mxu0 0
    %266 = vmatpush1.bf16.msra.mxu0 0
    %267 = vmatprep.subr.bf16.mxu0 0
    %268 = vmatpush1.bf16.msra.mxu0 0
    %269 = vmatprep.subr.bf16.mxu0 0
    %270 = vmatpush1.bf16.msra.mxu0 0
    %271 = vmatprep.subr.bf16.mxu0 0
    %272 = vmatpush1.bf16.msra.mxu0 0
    %273 = vmatprep.subr.bf16.mxu0 0
    %274 = vmatpush1.bf16.msra.mxu0 0
    %275 = vmatprep.subr.bf16.mxu0 0
    %276 = vmatpush1.bf16.msra.mxu0 0
    %277 = vmatprep.subr.bf16.mxu0 0
    %278 = vmatpush1.bf16.msra.mxu0 0
    %279 = vmatprep.mubr.bf16.mxu0 0
    %280 = vmatmul.mubr.bf16.gmra.mrb[0].mxu0 %v128
    %v281 = vpop.f32.mrb[0].mxu0
    %v282 = vadd.f32 0.0, %v281
    %v283 = vpop.f32.mrb[0].mxu0
    %v284 = vadd.f32 0.0, %v283
    %v285 = vpop.f32.mrb[0].mxu0
    %v286 = vadd.f32 0.0, %v285
    %v287 = vpop.f32.mrb[0].mxu0
    %v288 = vadd.f32 0.0, %v287
    %289 = vdwg.mxu0
    %290 = vmatprep.subr.bf16.mxu0 %v106
    %291 = vmatpush1.bf16.msra.mxu0 %v105
    %292 = vmatprep.subr.bf16.mxu0 %v156
    %293 = vmatpush1.bf16.msra.mxu0 %v153
    %294 = vmatprep.subr.bf16.mxu0 0
    %295 = vmatpush1.bf16.msra.mxu0 0
    %296 = vmatprep.subr.bf16.mxu0 0
    %297 = vmatpush1.bf16.msra.mxu0 0
    %298 = vmatprep.subr.bf16.mxu0 0
    %299 = vmatpush1.bf16.msra.mxu0 0
    %300 = vmatprep.subr.bf16.mxu0 0
    %301 = vmatpush1.bf16.msra.mxu0 0
    %302 = vmatprep.subr.bf16.mxu0 0
    %303 = vmatpush1.bf16.msra.mxu0 0
    %304 = vmatprep.subr.bf16.mxu0 0
    %305 = vmatpush1.bf16.msra.mxu0 0
    %306 = vmatprep.subr.bf16.mxu0 0
    %307 = vmatpush1.bf16.msra.mxu0 0
    %308 = vmatprep.subr.bf16.mxu0 0
    %309 = vmatpush1.bf16.msra.mxu0 0
    %310 = vmatprep.subr.bf16.mxu0 0
    %311 = vmatpush1.bf16.msra.mxu0 0
    %312 = vmatprep.subr.bf16.mxu0 0
    %313 = vmatpush1.bf16.msra.mxu0 0
    %314 = vmatprep.subr.bf16.mxu0 0
    %315 = vmatpush1.bf16.msra.mxu0 0
    %316 = vmatprep.subr.bf16.mxu0 0
    %317 = vmatpush1.bf16.msra.mxu0 0
    %318 = vmatprep.subr.bf16.mxu0 0
    %319 = vmatpush1.bf16.msra.mxu0 0
    %320 = vmatprep.subr.bf16.mxu0 0
    %321 = vmatpush1.bf16.msra.mxu0 0
    %322 = vmatprep.mubr.bf16.mxu0 0
    %323 = vmatmul.mubr.bf16.gmra.mrb[0].mxu0 %v128
    %v324 = vpop.f32.mrb[0].mxu0
    %v325 = vadd.f32 0.0, %v324
    %v326 = vpop.f32.mrb[0].mxu0
    %v327 = vadd.f32 0.0, %v326
    %v328 = vpop.f32.mrb[0].mxu0
    %v329 = vadd.f32 0.0, %v328
    %v330 = vpop.f32.mrb[0].mxu0
    %v331 = vadd.f32 0.0, %v330
    %332 = vdwg.mxu0
    %333 = vmatprep.subr.bf16.mxu0 0
    %334 = vmatpush1.bf16.msra.mxu0 %v107
    %335 = vmatprep.subr.bf16.mxu0 0
    %336 = vmatpush1.bf16.msra.mxu0 %v159
    %337 = vmatprep.subr.bf16.mxu0 0
    %338 = vmatpush1.bf16.msra.mxu0 0
    %339 = vmatprep.subr.bf16.mxu0 0
    %340 = vmatpush1.bf16.msra.mxu0 0
    %341 = vmatprep.subr.bf16.mxu0 0
    %342 = vmatpush1.bf16.msra.mxu0 0
    %343 = vmatprep.subr.bf16.mxu0 0
    %344 = vmatpush1.bf16.msra.mxu0 0
    %345 = vmatprep.subr.bf16.mxu0 0
    %346 = vmatpush1.bf16.msra.mxu0 0
    %347 = vmatprep.subr.bf16.mxu0 0
    %348 = vmatpush1.bf16.msra.mxu0 0
    %349 = vmatprep.subr.bf16.mxu0 0
    %350 = vmatpush1.bf16.msra.mxu0 0
    %351 = vmatprep.subr.bf16.mxu0 0
    %352 = vmatpush1.bf16.msra.mxu0 0
    %353 = vmatprep.subr.bf16.mxu0 0
    %354 = vmatpush1.bf16.msra.mxu0 0
    %355 = vmatprep.subr.bf16.mxu0 0
    %356 = vmatpush1.bf16.msra.mxu0 0
    %357 = vmatprep.subr.bf16.mxu0 0
    %358 = vmatpush1.bf16.msra.mxu0 0
    %359 = vmatprep.subr.bf16.mxu0 0
    %360 = vmatpush1.bf16.msra.mxu0 0
    %361 = vmatprep.subr.bf16.mxu0 0
    %362 = vmatpush1.bf16.msra.mxu0 0
    %363 = vmatprep.subr.bf16.mxu0 0
    %364 = vmatpush1.bf16.msra.mxu0 0
    %365 = vmatprep.mubr.bf16.mxu0 0
    %366 = vmatmul.mubr.bf16.gmra.mrb[0].mxu0 %v128
    %v367 = vpop.f32.mrb[0].mxu0
    %v368 = vadd.f32 0.0, %v367
    %v369 = vpop.f32.mrb[0].mxu0
    %v370 = vpop.f32.mrb[0].mxu0
    %v371 = vadd.f32 0.0, %v370
    %v372 = vpop.f32.mrb[0].mxu0
    %373 = vdwg.mxu0
    %s374 = scalar_lea.vmem %s0, 144
    %v375 = vld [vmem:[%s374] sm:$0xff]
    %v376 = vld [vmem:[%s374 + $0x8] sm:$0xff]
    %v377 = vld [vmem:[%s374 + $0x10] sm:$0xff]
    %v378 = vld [vmem:[%s374 + $0x18] sm:$0xff]
    %v379 = vld [vmem:[%s374 + $0x20] sm:$0xf]
    %v380 = vld [vmem:[%s374 + $0x24] sm:$0xff]
    %v381 = vld [vmem:[%s374 + $0x2c] sm:$0xff]
    %v382 = vld [vmem:[%s374 + $0x34] sm:$0xff]
    %v383 = vld [vmem:[%s374 + $0x3c] sm:$0xff]
    %v384 = vld [vmem:[%s374 + $0x44] sm:$0xf]
    %v385 = vld [vmem:[%s374 + $0x48] sm:$0xff]
    %v386 = vld [vmem:[%s374 + $0x50] sm:$0xff]
    %v387 = vld [vmem:[%s374 + $0x58] sm:$0xff]
    %v388 = vld [vmem:[%s374 + $0x60] sm:$0xff]
    %v389 = vld [vmem:[%s374 + $0x68] sm:$0xf]
    %v390 = vld [vmem:[%s374 + $0x6c] sm:$0x11]
    %v391 = vld [vmem:[%s374 + $0x74] sm:$0x11]
    %v392 = vld [vmem:[%s374 + $0x7c] sm:$0x11]
    %v393 = vld [vmem:[%s374 + $0x84] sm:$0x11]
    %v394 = vld [vmem:[%s374 + $0x8c] sm:$0x1]
    %v415 = vunpack.c.l.b16 %v375
    %v416 = vunpack.c.h.b16 %v375
    %v417 = vunpack.c.l.b16 %v376
    %v418 = vunpack.c.h.b16 %v376
    %v419 = vunpack.c.l.b16 %v377
    %v420 = vunpack.c.h.b16 %v377
    %v421 = vunpack.c.l.b16 %v378
    %v422 = vunpack.c.h.b16 %v378
    %v423 = vunpack.c.l.b16 %v379
    %v424 = vunpack.c.l.b16 %v380
    %v425 = vunpack.c.h.b16 %v380
    %v426 = vunpack.c.l.b16 %v381
    %v427 = vunpack.c.h.b16 %v381
    %v428 = vunpack.c.l.b16 %v382
    %v429 = vunpack.c.h.b16 %v382
    %v430 = vunpack.c.l.b16 %v383
    %v431 = vunpack.c.h.b16 %v383
    %v432 = vunpack.c.l.b16 %v384
    %v433 = vunpack.c.l.b16 %v385
    %v434 = vunpack.c.h.b16 %v385
    %v435 = vunpack.c.l.b16 %v386
    %v436 = vunpack.c.h.b16 %v386
    %v437 = vunpack.c.l.b16 %v387
    %v438 = vunpack.c.h.b16 %v387
    %v439 = vunpack.c.l.b16 %v388
    %v440 = vunpack.c.h.b16 %v388
    %v441 = vunpack.c.l.b16 %v389
    %v442 = vunpack.c.l.b16 %v390
    %v443 = vunpack.c.h.b16 %v390
    %v444 = vunpack.c.l.b16 %v391
    %v445 = vunpack.c.h.b16 %v391
    %v446 = vunpack.c.l.b16 %v392
    %v447 = vunpack.c.h.b16 %v392
    %v448 = vunpack.c.l.b16 %v393
    %v449 = vunpack.c.h.b16 %v393
    %v450 = vunpack.c.l.b16 %v394
    %v451 = vpack.c.b16 %v424, %v415
    %v452 = vpack.c.b16 %v425, %v416
    %v453 = vpack.c.b16 %v426, %v417
    %v454 = vpack.c.b16 %v427, %v418
    %v455 = vpack.c.b16 %v428, %v419
    %v456 = vpack.c.b16 %v429, %v420
    %v457 = vpack.c.b16 %v430, %v421
    %v458 = vpack.c.b16 %v431, %v422
    %v459 = vpack.c.b16 %v432, %v423
    %v460 = vpack.c.b16 %v442, %v433
    %v461 = vpack.c.b16 %v443, %v434
    %v462 = vpack.c.b16 %v444, %v435
    %v463 = vpack.c.b16 %v445, %v436
    %v464 = vpack.c.b16 %v446, %v437
    %v465 = vpack.c.b16 %v447, %v438
    %v466 = vpack.c.b16 %v448, %v439
    %v467 = vpack.c.b16 %v449, %v440
    %v468 = vpack.c.b16 %v450, %v441
    %v479 = vand.u32 %v460, %v133
    %v482 = vand.u32 %v461, %v133
    %v485 = vand.u32 %v462, %v133
    %v488 = vand.u32 %v463, %v133
    %v491 = vand.u32 %v464, %v133
    %v494 = vand.u32 %v465, %v133
    %v497 = vand.u32 %v466, %v133
    %v500 = vand.u32 %v467, %v133
    %v503 = vand.u32 %v468, %v133
    %505 = vmatprep.subr.bf16.mxu0 %v452
    %506 = vmatpush1.bf16.msra.mxu0 %v451
    %507 = vmatprep.subr.bf16.mxu0 %v482
    %508 = vmatpush1.bf16.msra.mxu0 %v479
    %509 = vmatprep.subr.bf16.mxu0 0
    %510 = vmatpush1.bf16.msra.mxu0 0
    %511 = vmatprep.subr.bf16.mxu0 0
    %512 = vmatpush1.bf16.msra.mxu0 0
    %513 = vmatprep.subr.bf16.mxu0 0
    %514 = vmatpush1.bf16.msra.mxu0 0
    %515 = vmatprep.subr.bf16.mxu0 0
    %516 = vmatpush1.bf16.msra.mxu0 0
    %517 = vmatprep.subr.bf16.mxu0 0
    %518 = vmatpush1.bf16.msra.mxu0 0
    %519 = vmatprep.subr.bf16.mxu0 0
    %520 = vmatpush1.bf16.msra.mxu0 0
    %521 = vmatprep.subr.bf16.mxu0 0
    %522 = vmatpush1.bf16.msra.mxu0 0
    %523 = vmatprep.subr.bf16.mxu0 0
    %524 = vmatpush1.bf16.msra.mxu0 0
    %525 = vmatprep.subr.bf16.mxu0 0
    %526 = vmatpush1.bf16.msra.mxu0 0
    %527 = vmatprep.subr.bf16.mxu0 0
    %528 = vmatpush1.bf16.msra.mxu0 0
    %529 = vmatprep.subr.bf16.mxu0 0
    %530 = vmatpush1.bf16.msra.mxu0 0
    %531 = vmatprep.subr.bf16.mxu0 0
    %532 = vmatpush1.bf16.msra.mxu0 0
    %533 = vmatprep.subr.bf16.mxu0 0
    %534 = vmatpush1.bf16.msra.mxu0 0
    %535 = vmatprep.subr.bf16.mxu0 0
    %536 = vmatpush1.bf16.msra.mxu0 0
    %537 = vmatprep.mubr.bf16.mxu0 0
    %538 = vmatmul.mubr.bf16.gmra.mrb[0].mxu0 %v128
    %v539 = vpop.f32.mrb[0].mxu0
    %v540 = vadd.f32 0.0, %v539
    %v541 = vpop.f32.mrb[0].mxu0
    %v542 = vadd.f32 0.0, %v541
    %v543 = vpop.f32.mrb[0].mxu0
    %v544 = vadd.f32 0.0, %v543
    %v545 = vpop.f32.mrb[0].mxu0
    %v546 = vadd.f32 0.0, %v545
    %547 = vdwg.mxu0
    %548 = vmatprep.subr.bf16.mxu0 %v454
    %549 = vmatpush1.bf16.msra.mxu0 %v453
    %550 = vmatprep.subr.bf16.mxu0 %v488
    %551 = vmatpush1.bf16.msra.mxu0 %v485
    %552 = vmatprep.subr.bf16.mxu0 0
    %553 = vmatpush1.bf16.msra.mxu0 0
    %554 = vmatprep.subr.bf16.mxu0 0
    %555 = vmatpush1.bf16.msra.mxu0 0
    %556 = vmatprep.subr.bf16.mxu0 0
    %557 = vmatpush1.bf16.msra.mxu0 0
    %558 = vmatprep.subr.bf16.mxu0 0
    %559 = vmatpush1.bf16.msra.mxu0 0
    %560 = vmatprep.subr.bf16.mxu0 0
    %561 = vmatpush1.bf16.msra.mxu0 0
    %562 = vmatprep.subr.bf16.mxu0 0
    %563 = vmatpush1.bf16.msra.mxu0 0
    %564 = vmatprep.subr.bf16.mxu0 0
    %565 = vmatpush1.bf16.msra.mxu0 0
    %566 = vmatprep.subr.bf16.mxu0 0
    %567 = vmatpush1.bf16.msra.mxu0 0
    %568 = vmatprep.subr.bf16.mxu0 0
    %569 = vmatpush1.bf16.msra.mxu0 0
    %570 = vmatprep.subr.bf16.mxu0 0
    %571 = vmatpush1.bf16.msra.mxu0 0
    %572 = vmatprep.subr.bf16.mxu0 0
    %573 = vmatpush1.bf16.msra.mxu0 0
    %574 = vmatprep.subr.bf16.mxu0 0
    %575 = vmatpush1.bf16.msra.mxu0 0
    %576 = vmatprep.subr.bf16.mxu0 0
    %577 = vmatpush1.bf16.msra.mxu0 0
    %578 = vmatprep.subr.bf16.mxu0 0
    %579 = vmatpush1.bf16.msra.mxu0 0
    %580 = vmatprep.mubr.bf16.mxu0 0
    %581 = vmatmul.mubr.bf16.gmra.mrb[0].mxu0 %v128
    %v582 = vpop.f32.mrb[0].mxu0
    %v583 = vadd.f32 0.0, %v582
    %v584 = vpop.f32.mrb[0].mxu0
    %v585 = vadd.f32 0.0, %v584
    %v586 = vpop.f32.mrb[0].mxu0
    %v587 = vadd.f32 0.0, %v586
    %v588 = vpop.f32.mrb[0].mxu0
    %v589 = vadd.f32 0.0, %v588
    %590 = vdwg.mxu0
    %591 = vmatprep.subr.bf16.mxu0 %v456
    %592 = vmatpush1.bf16.msra.mxu0 %v455
    %593 = vmatprep.subr.bf16.mxu0 %v494
    %594 = vmatpush1.bf16.msra.mxu0 %v491
    %595 = vmatprep.subr.bf16.mxu0 0
    %596 = vmatpush1.bf16.msra.mxu0 0
    %597 = vmatprep.subr.bf16.mxu0 0
    %598 = vmatpush1.bf16.msra.mxu0 0
    %599 = vmatprep.subr.bf16.mxu0 0
    %600 = vmatpush1.bf16.msra.mxu0 0
    %601 = vmatprep.subr.bf16.mxu0 0
    %602 = vmatpush1.bf16.msra.mxu0 0
    %603 = vmatprep.subr.bf16.mxu0 0
    %604 = vmatpush1.bf16.msra.mxu0 0
    %605 = vmatprep.subr.bf16.mxu0 0
    %606 = vmatpush1.bf16.msra.mxu0 0
    %607 = vmatprep.subr.bf16.mxu0 0
    %608 = vmatpush1.bf16.msra.mxu0 0
    %609 = vmatprep.subr.bf16.mxu0 0
    %610 = vmatpush1.bf16.msra.mxu0 0
    %611 = vmatprep.subr.bf16.mxu0 0
    %612 = vmatpush1.bf16.msra.mxu0 0
    %613 = vmatprep.subr.bf16.mxu0 0
    %614 = vmatpush1.bf16.msra.mxu0 0
    %615 = vmatprep.subr.bf16.mxu0 0
    %616 = vmatpush1.bf16.msra.mxu0 0
    %617 = vmatprep.subr.bf16.mxu0 0
    %618 = vmatpush1.bf16.msra.mxu0 0
    %619 = vmatprep.subr.bf16.mxu0 0
    %620 = vmatpush1.bf16.msra.mxu0 0
    %621 = vmatprep.subr.bf16.mxu0 0
    %622 = vmatpush1.bf16.msra.mxu0 0
    %623 = vmatprep.mubr.bf16.mxu0 0
    %624 = vmatmul.mubr.bf16.gmra.mrb[0].mxu0 %v128
    %v625 = vpop.f32.mrb[0].mxu0
    %v626 = vadd.f32 0.0, %v625
    %v627 = vpop.f32.mrb[0].mxu0
    %v628 = vadd.f32 0.0, %v627
    %v629 = vpop.f32.mrb[0].mxu0
    %v630 = vadd.f32 0.0, %v629
    %v631 = vpop.f32.mrb[0].mxu0
    %v632 = vadd.f32 0.0, %v631
    %633 = vdwg.mxu0
    %634 = vmatprep.subr.bf16.mxu0 %v458
    %635 = vmatpush1.bf16.msra.mxu0 %v457
    %636 = vmatprep.subr.bf16.mxu0 %v500
    %637 = vmatpush1.bf16.msra.mxu0 %v497
    %638 = vmatprep.subr.bf16.mxu0 0
    %639 = vmatpush1.bf16.msra.mxu0 0
    %640 = vmatprep.subr.bf16.mxu0 0
    %641 = vmatpush1.bf16.msra.mxu0 0
    %642 = vmatprep.subr.bf16.mxu0 0
    %643 = vmatpush1.bf16.msra.mxu0 0
    %644 = vmatprep.subr.bf16.mxu0 0
    %645 = vmatpush1.bf16.msra.mxu0 0
    %646 = vmatprep.subr.bf16.mxu0 0
    %647 = vmatpush1.bf16.msra.mxu0 0
    %648 = vmatprep.subr.bf16.mxu0 0
    %649 = vmatpush1.bf16.msra.mxu0 0
    %650 = vmatprep.subr.bf16.mxu0 0
    %651 = vmatpush1.bf16.msra.mxu0 0
    %652 = vmatprep.subr.bf16.mxu0 0
    %653 = vmatpush1.bf16.msra.mxu0 0
    %654 = vmatprep.subr.bf16.mxu0 0
    %655 = vmatpush1.bf16.msra.mxu0 0
    %656 = vmatprep.subr.bf16.mxu0 0
    %657 = vmatpush1.bf16.msra.mxu0 0
    %658 = vmatprep.subr.bf16.mxu0 0
    %659 = vmatpush1.bf16.msra.mxu0 0
    %660 = vmatprep.subr.bf16.mxu0 0
    %661 = vmatpush1.bf16.msra.mxu0 0
    %662 = vmatprep.subr.bf16.mxu0 0
    %663 = vmatpush1.bf16.msra.mxu0 0
    %664 = vmatprep.subr.bf16.mxu0 0
    %665 = vmatpush1.bf16.msra.mxu0 0
    %666 = vmatprep.mubr.bf16.mxu0 0
    %667 = vmatmul.mubr.bf16.gmra.mrb[0].mxu0 %v128
    %v668 = vpop.f32.mrb[0].mxu0
    %v669 = vadd.f32 0.0, %v668
    %v670 = vpop.f32.mrb[0].mxu0
    %v671 = vadd.f32 0.0, %v670
    %v672 = vpop.f32.mrb[0].mxu0
    %v673 = vadd.f32 0.0, %v672
    %v674 = vpop.f32.mrb[0].mxu0
    %v675 = vadd.f32 0.0, %v674
    %676 = vdwg.mxu0
    %677 = vmatprep.subr.bf16.mxu0 0
    %678 = vmatpush1.bf16.msra.mxu0 %v459
    %679 = vmatprep.subr.bf16.mxu0 0
    %680 = vmatpush1.bf16.msra.mxu0 %v503
    %681 = vmatprep.subr.bf16.mxu0 0
    %682 = vmatpush1.bf16.msra.mxu0 0
    %683 = vmatprep.subr.bf16.mxu0 0
    %684 = vmatpush1.bf16.msra.mxu0 0
    %685 = vmatprep.subr.bf16.mxu0 0
    %686 = vmatpush1.bf16.msra.mxu0 0
    %687 = vmatprep.subr.bf16.mxu0 0
    %688 = vmatpush1.bf16.msra.mxu0 0
    %689 = vmatprep.subr.bf16.mxu0 0
    %690 = vmatpush1.bf16.msra.mxu0 0
    %691 = vmatprep.subr.bf16.mxu0 0
    %692 = vmatpush1.bf16.msra.mxu0 0
    %693 = vmatprep.subr.bf16.mxu0 0
    %694 = vmatpush1.bf16.msra.mxu0 0
    %695 = vmatprep.subr.bf16.mxu0 0
    %696 = vmatpush1.bf16.msra.mxu0 0
    %697 = vmatprep.subr.bf16.mxu0 0
    %698 = vmatpush1.bf16.msra.mxu0 0
    %699 = vmatprep.subr.bf16.mxu0 0
    %700 = vmatpush1.bf16.msra.mxu0 0
    %701 = vmatprep.subr.bf16.mxu0 0
    %702 = vmatpush1.bf16.msra.mxu0 0
    %703 = vmatprep.subr.bf16.mxu0 0
    %704 = vmatpush1.bf16.msra.mxu0 0
    %705 = vmatprep.subr.bf16.mxu0 0
    %706 = vmatpush1.bf16.msra.mxu0 0
    %707 = vmatprep.subr.bf16.mxu0 0
    %708 = vmatpush1.bf16.msra.mxu0 0
    %709 = vmatprep.mubr.bf16.mxu0 0
    %710 = vmatmul.mubr.bf16.gmra.mrb[0].mxu0 %v128
    %v711 = vpop.f32.mrb[0].mxu0
    %v712 = vadd.f32 0.0, %v711
    %v713 = vpop.f32.mrb[0].mxu0
    %v714 = vpop.f32.mrb[0].mxu0
    %v715 = vadd.f32 0.0, %v714
    %v716 = vpop.f32.mrb[0].mxu0
    %717 = vdwg.mxu0
    %v718 = vmax.f32 %v196, %v540
    %v719 = vmax.f32 %v198, %v542
    %v720 = vmax.f32 %v239, %v583
    %v721 = vmax.f32 %v241, %v585
    %v722 = vmax.f32 %v282, %v626
    %v723 = vmax.f32 %v284, %v628
    %v724 = vmax.f32 %v325, %v669
    %v725 = vmax.f32 %v327, %v671
    %v726 = vmax.f32 %v368, %v712
    %v727 = vmax.f32 %v200, %v544
    %v728 = vmax.f32 %v202, %v546
    %v729 = vmax.f32 %v243, %v587
    %v730 = vmax.f32 %v245, %v589
    %v731 = vmax.f32 %v286, %v630
    %v732 = vmax.f32 %v288, %v632
    %v733 = vmax.f32 %v329, %v673
    %v734 = vmax.f32 %v331, %v675
    %v735 = vmax.f32 %v371, %v715
    %s736 = scalar_lea.vmem %s0, 288
    %v737 = vld [vmem:[%s736] sm:$0xff]
    %v738 = vld [vmem:[%s736 + $0x8] sm:$0xff]
    %v739 = vld [vmem:[%s736 + $0x10] sm:$0xff]
    %v740 = vld [vmem:[%s736 + $0x18] sm:$0xff]
    %v741 = vld [vmem:[%s736 + $0x20] sm:$0xf]
    %v742 = vld [vmem:[%s736 + $0x24] sm:$0xff]
    %v743 = vld [vmem:[%s736 + $0x2c] sm:$0xff]
    %v744 = vld [vmem:[%s736 + $0x34] sm:$0xff]
    %v745 = vld [vmem:[%s736 + $0x3c] sm:$0xff]
    %v746 = vld [vmem:[%s736 + $0x44] sm:$0xf]
    %v747 = vld [vmem:[%s736 + $0x48] sm:$0xff]
    %v748 = vld [vmem:[%s736 + $0x50] sm:$0xff]
    %v749 = vld [vmem:[%s736 + $0x58] sm:$0xff]
    %v750 = vld [vmem:[%s736 + $0x60] sm:$0xff]
    %v751 = vld [vmem:[%s736 + $0x68] sm:$0xf]
    %v752 = vld [vmem:[%s736 + $0x6c] sm:$0x11]
    %v753 = vld [vmem:[%s736 + $0x74] sm:$0x11]
    %v754 = vld [vmem:[%s736 + $0x7c] sm:$0x11]
    %v755 = vld [vmem:[%s736 + $0x84] sm:$0x11]
    %v756 = vld [vmem:[%s736 + $0x8c] sm:$0x1]
    %v777 = vunpack.c.l.b16 %v737
    %v778 = vunpack.c.h.b16 %v737
    %v779 = vunpack.c.l.b16 %v738
    %v780 = vunpack.c.h.b16 %v738
    %v781 = vunpack.c.l.b16 %v739
    %v782 = vunpack.c.h.b16 %v739
    %v783 = vunpack.c.l.b16 %v740
    %v784 = vunpack.c.h.b16 %v740
    %v785 = vunpack.c.l.b16 %v741
    %v786 = vunpack.c.l.b16 %v742
    %v787 = vunpack.c.h.b16 %v742
    %v788 = vunpack.c.l.b16 %v743
    %v789 = vunpack.c.h.b16 %v743
    %v790 = vunpack.c.l.b16 %v744
    %v791 = vunpack.c.h.b16 %v744
    %v792 = vunpack.c.l.b16 %v745
    %v793 = vunpack.c.h.b16 %v745
    %v794 = vunpack.c.l.b16 %v746
    %v795 = vunpack.c.l.b16 %v747
    %v796 = vunpack.c.h.b16 %v747
    %v797 = vunpack.c.l.b16 %v748
    %v798 = vunpack.c.h.b16 %v748
    %v799 = vunpack.c.l.b16 %v749
    %v800 = vunpack.c.h.b16 %v749
    %v801 = vunpack.c.l.b16 %v750
    %v802 = vunpack.c.h.b16 %v750
    %v803 = vunpack.c.l.b16 %v751
    %v804 = vunpack.c.l.b16 %v752
    %v805 = vunpack.c.h.b16 %v752
    %v806 = vunpack.c.l.b16 %v753
    %v807 = vunpack.c.h.b16 %v753
    %v808 = vunpack.c.l.b16 %v754
    %v809 = vunpack.c.h.b16 %v754
    %v810 = vunpack.c.l.b16 %v755
    %v811 = vunpack.c.h.b16 %v755
    %v812 = vunpack.c.l.b16 %v756
    %v813 = vpack.c.b16 %v786, %v777
    %v814 = vpack.c.b16 %v787, %v778
    %v815 = vpack.c.b16 %v788, %v779
    %v816 = vpack.c.b16 %v789, %v780
    %v817 = vpack.c.b16 %v790, %v781
    %v818 = vpack.c.b16 %v791, %v782
    %v819 = vpack.c.b16 %v792, %v783
    %v820 = vpack.c.b16 %v793, %v784
    %v821 = vpack.c.b16 %v794, %v785
    %v822 = vpack.c.b16 %v804, %v795
    %v823 = vpack.c.b16 %v805, %v796
    %v824 = vpack.c.b16 %v806, %v797
    %v825 = vpack.c.b16 %v807, %v798
    %v826 = vpack.c.b16 %v808, %v799
    %v827 = vpack.c.b16 %v809, %v800
    %v828 = vpack.c.b16 %v810, %v801
    %v829 = vpack.c.b16 %v811, %v802
    %v830 = vpack.c.b16 %v812, %v803
    %v841 = vand.u32 %v822, %v133
    %v844 = vand.u32 %v823, %v133
    %v847 = vand.u32 %v824, %v133
    %v850 = vand.u32 %v825, %v133
    %v853 = vand.u32 %v826, %v133
    %v856 = vand.u32 %v827, %v133
    %v859 = vand.u32 %v828, %v133
    %v862 = vand.u32 %v829, %v133
    %v865 = vand.u32 %v830, %v133
    %867 = vmatprep.subr.bf16.mxu0 %v814
    %868 = vmatpush1.bf16.msra.mxu0 %v813
    %869 = vmatprep.subr.bf16.mxu0 %v844
    %870 = vmatpush1.bf16.msra.mxu0 %v841
    %871 = vmatprep.subr.bf16.mxu0 0
    %872 = vmatpush1.bf16.msra.mxu0 0
    %873 = vmatprep.subr.bf16.mxu0 0
    %874 = vmatpush1.bf16.msra.mxu0 0
    %875 = vmatprep.subr.bf16.mxu0 0
    %876 = vmatpush1.bf16.msra.mxu0 0
    %877 = vmatprep.subr.bf16.mxu0 0
    %878 = vmatpush1.bf16.msra.mxu0 0
    %879 = vmatprep.subr.bf16.mxu0 0
    %880 = vmatpush1.bf16.msra.mxu0 0
    %881 = vmatprep.subr.bf16.mxu0 0
    %882 = vmatpush1.bf16.msra.mxu0 0
    %883 = vmatprep.subr.bf16.mxu0 0
    %884 = vmatpush1.bf16.msra.mxu0 0
    %885 = vmatprep.subr.bf16.mxu0 0
    %886 = vmatpush1.bf16.msra.mxu0 0
    %887 = vmatprep.subr.bf16.mxu0 0
    %888 = vmatpush1.bf16.msra.mxu0 0
    %889 = vmatprep.subr.bf16.mxu0 0
    %890 = vmatpush1.bf16.msra.mxu0 0
    %891 = vmatprep.subr.bf16.mxu0 0
    %892 = vmatpush1.bf16.msra.mxu0 0
    %893 = vmatprep.subr.bf16.mxu0 0
    %894 = vmatpush1.bf16.msra.mxu0 0
    %895 = vmatprep.subr.bf16.mxu0 0
    %896 = vmatpush1.bf16.msra.mxu0 0
    %897 = vmatprep.subr.bf16.mxu0 0
    %898 = vmatpush1.bf16.msra.mxu0 0
    %899 = vmatprep.mubr.bf16.mxu0 0
    %900 = vmatmul.mubr.bf16.gmra.mrb[0].mxu0 %v128
    %v901 = vpop.f32.mrb[0].mxu0
    %v902 = vadd.f32 0.0, %v901
    %v903 = vpop.f32.mrb[0].mxu0
    %v904 = vadd.f32 0.0, %v903
    %v905 = vpop.f32.mrb[0].mxu0
    %v906 = vadd.f32 0.0, %v905
    %v907 = vpop.f32.mrb[0].mxu0
    %v908 = vadd.f32 0.0, %v907
    %909 = vdwg.mxu0
    %910 = vmatprep.subr.bf16.mxu0 %v816
    %911 = vmatpush1.bf16.msra.mxu0 %v815
    %912 = vmatprep.subr.bf16.mxu0 %v850
    %913 = vmatpush1.bf16.msra.mxu0 %v847
    %914 = vmatprep.subr.bf16.mxu0 0
    %915 = vmatpush1.bf16.msra.mxu0 0
    %916 = vmatprep.subr.bf16.mxu0 0
    %917 = vmatpush1.bf16.msra.mxu0 0
    %918 = vmatprep.subr.bf16.mxu0 0
    %919 = vmatpush1.bf16.msra.mxu0 0
    %920 = vmatprep.subr.bf16.mxu0 0
    %921 = vmatpush1.bf16.msra.mxu0 0
    %922 = vmatprep.subr.bf16.mxu0 0
    %923 = vmatpush1.bf16.msra.mxu0 0
    %924 = vmatprep.subr.bf16.mxu0 0
    %925 = vmatpush1.bf16.msra.mxu0 0
    %926 = vmatprep.subr.bf16.mxu0 0
    %927 = vmatpush1.bf16.msra.mxu0 0
    %928 = vmatprep.subr.bf16.mxu0 0
    %929 = vmatpush1.bf16.msra.mxu0 0
    %930 = vmatprep.subr.bf16.mxu0 0
    %931 = vmatpush1.bf16.msra.mxu0 0
    %932 = vmatprep.subr.bf16.mxu0 0
    %933 = vmatpush1.bf16.msra.mxu0 0
    %934 = vmatprep.subr.bf16.mxu0 0
    %935 = vmatpush1.bf16.msra.mxu0 0
    %936 = vmatprep.subr.bf16.mxu0 0
    %937 = vmatpush1.bf16.msra.mxu0 0
    %938 = vmatprep.subr.bf16.mxu0 0
    %939 = vmatpush1.bf16.msra.mxu0 0
    %940 = vmatprep.subr.bf16.mxu0 0
    %941 = vmatpush1.bf16.msra.mxu0 0
    %942 = vmatprep.mubr.bf16.mxu0 0
    %943 = vmatmul.mubr.bf16.gmra.mrb[0].mxu0 %v128
    %v944 = vpop.f32.mrb[0].mxu0
    %v945 = vadd.f32 0.0, %v944
    %v946 = vpop.f32.mrb[0].mxu0
    %v947 = vadd.f32 0.0, %v946
    %v948 = vpop.f32.mrb[0].mxu0
    %v949 = vadd.f32 0.0, %v948
    %v950 = vpop.f32.mrb[0].mxu0
    %v951 = vadd.f32 0.0, %v950
    %952 = vdwg.mxu0
    %953 = vmatprep.subr.bf16.mxu0 %v818
    %954 = vmatpush1.bf16.msra.mxu0 %v817
    %955 = vmatprep.subr.bf16.mxu0 %v856
    %956 = vmatpush1.bf16.msra.mxu0 %v853
    %957 = vmatprep.subr.bf16.mxu0 0
    %958 = vmatpush1.bf16.msra.mxu0 0
    %959 = vmatprep.subr.bf16.mxu0 0
    %960 = vmatpush1.bf16.msra.mxu0 0
    %961 = vmatprep.subr.bf16.mxu0 0
    %962 = vmatpush1.bf16.msra.mxu0 0
    %963 = vmatprep.subr.bf16.mxu0 0
    %964 = vmatpush1.bf16.msra.mxu0 0
    %965 = vmatprep.subr.bf16.mxu0 0
    %966 = vmatpush1.bf16.msra.mxu0 0
    %967 = vmatprep.subr.bf16.mxu0 0
    %968 = vmatpush1.bf16.msra.mxu0 0
    %969 = vmatprep.subr.bf16.mxu0 0
    %970 = vmatpush1.bf16.msra.mxu0 0
    %971 = vmatprep.subr.bf16.mxu0 0
    %972 = vmatpush1.bf16.msra.mxu0 0
    %973 = vmatprep.subr.bf16.mxu0 0
    %974 = vmatpush1.bf16.msra.mxu0 0
    %975 = vmatprep.subr.bf16.mxu0 0
    %976 = vmatpush1.bf16.msra.mxu0 0
    %977 = vmatprep.subr.bf16.mxu0 0
    %978 = vmatpush1.bf16.msra.mxu0 0
    %979 = vmatprep.subr.bf16.mxu0 0
    %980 = vmatpush1.bf16.msra.mxu0 0
    %981 = vmatprep.subr.bf16.mxu0 0
    %982 = vmatpush1.bf16.msra.mxu0 0
    %983 = vmatprep.subr.bf16.mxu0 0
    %984 = vmatpush1.bf16.msra.mxu0 0
    %985 = vmatprep.mubr.bf16.mxu0 0
    %986 = vmatmul.mubr.bf16.gmra.mrb[0].mxu0 %v128
    %v987 = vpop.f32.mrb[0].mxu0
    %v988 = vadd.f32 0.0, %v987
    %v989 = vpop.f32.mrb[0].mxu0
    %v990 = vadd.f32 0.0, %v989
    %v991 = vpop.f32.mrb[0].mxu0
    %v992 = vadd.f32 0.0, %v991
    %v993 = vpop.f32.mrb[0].mxu0
    %v994 = vadd.f32 0.0, %v993
    %995 = vdwg.mxu0
    %996 = vmatprep.subr.bf16.mxu0 %v820
    %997 = vmatpush1.bf16.msra.mxu0 %v819
    %998 = vmatprep.subr.bf16.mxu0 %v862
    %999 = vmatpush1.bf16.msra.mxu0 %v859
    %1000 = vmatprep.subr.bf16.mxu0 0
    %1001 = vmatpush1.bf16.msra.mxu0 0
    %1002 = vmatprep.subr.bf16.mxu0 0
    %1003 = vmatpush1.bf16.msra.mxu0 0
    %1004 = vmatprep.subr.bf16.mxu0 0
    %1005 = vmatpush1.bf16.msra.mxu0 0
    %1006 = vmatprep.subr.bf16.mxu0 0
    %1007 = vmatpush1.bf16.msra.mxu0 0
    %1008 = vmatprep.subr.bf16.mxu0 0
    %1009 = vmatpush1.bf16.msra.mxu0 0
    %1010 = vmatprep.subr.bf16.mxu0 0
    %1011 = vmatpush1.bf16.msra.mxu0 0
    %1012 = vmatprep.subr.bf16.mxu0 0
    %1013 = vmatpush1.bf16.msra.mxu0 0
    %1014 = vmatprep.subr.bf16.mxu0 0
    %1015 = vmatpush1.bf16.msra.mxu0 0
    %1016 = vmatprep.subr.bf16.mxu0 0
    %1017 = vmatpush1.bf16.msra.mxu0 0
    %1018 = vmatprep.subr.bf16.mxu0 0
    %1019 = vmatpush1.bf16.msra.mxu0 0
    %1020 = vmatprep.subr.bf16.mxu0 0
    %1021 = vmatpush1.bf16.msra.mxu0 0
    %1022 = vmatprep.subr.bf16.mxu0 0
    %1023 = vmatpush1.bf16.msra.mxu0 0
    %1024 = vmatprep.subr.bf16.mxu0 0
    %1025 = vmatpush1.bf16.msra.mxu0 0
    %1026 = vmatprep.subr.bf16.mxu0 0
    %1027 = vmatpush1.bf16.msra.mxu0 0
    %1028 = vmatprep.mubr.bf16.mxu0 0
    %1029 = vmatmul.mubr.bf16.gmra.mrb[0].mxu0 %v128
    %v1030 = vpop.f32.mrb[0].mxu0
    %v1031 = vadd.f32 0.0, %v1030
    %v1032 = vpop.f32.mrb[0].mxu0
    %v1033 = vadd.f32 0.0, %v1032
    %v1034 = vpop.f32.mrb[0].mxu0
    %v1035 = vadd.f32 0.0, %v1034
    %v1036 = vpop.f32.mrb[0].mxu0
    %v1037 = vadd.f32 0.0, %v1036
    %1038 = vdwg.mxu0
    %1039 = vmatprep.subr.bf16.mxu0 0
    %1040 = vmatpush1.bf16.msra.mxu0 %v821
    %1041 = vmatprep.subr.bf16.mxu0 0
    %1042 = vmatpush1.bf16.msra.mxu0 %v865
    %1043 = vmatprep.subr.bf16.mxu0 0
    %1044 = vmatpush1.bf16.msra.mxu0 0
    %1045 = vmatprep.subr.bf16.mxu0 0
    %1046 = vmatpush1.bf16.msra.mxu0 0
    %1047 = vmatprep.subr.bf16.mxu0 0
    %1048 = vmatpush1.bf16.msra.mxu0 0
    %1049 = vmatprep.subr.bf16.mxu0 0
    %1050 = vmatpush1.bf16.msra.mxu0 0
    %1051 = vmatprep.subr.bf16.mxu0 0
    %1052 = vmatpush1.bf16.msra.mxu0 0
    %1053 = vmatprep.subr.bf16.mxu0 0
    %1054 = vmatpush1.bf16.msra.mxu0 0
    %1055 = vmatprep.subr.bf16.mxu0 0
    %1056 = vmatpush1.bf16.msra.mxu0 0
    %1057 = vmatprep.subr.bf16.mxu0 0
    %1058 = vmatpush1.bf16.msra.mxu0 0
    %1059 = vmatprep.subr.bf16.mxu0 0
    %1060 = vmatpush1.bf16.msra.mxu0 0
    %1061 = vmatprep.subr.bf16.mxu0 0
    %1062 = vmatpush1.bf16.msra.mxu0 0
    %1063 = vmatprep.subr.bf16.mxu0 0
    %1064 = vmatpush1.bf16.msra.mxu0 0
    %1065 = vmatprep.subr.bf16.mxu0 0
    %1066 = vmatpush1.bf16.msra.mxu0 0
    %1067 = vmatprep.subr.bf16.mxu0 0
    %1068 = vmatpush1.bf16.msra.mxu0 0
    %1069 = vmatprep.subr.bf16.mxu0 0
    %1070 = vmatpush1.bf16.msra.mxu0 0
    %1071 = vmatprep.mubr.bf16.mxu0 0
    %1072 = vmatmul.mubr.bf16.gmra.mrb[0].mxu0 %v128
    %v1073 = vpop.f32.mrb[0].mxu0
    %v1074 = vadd.f32 0.0, %v1073
    %v1075 = vpop.f32.mrb[0].mxu0
    %v1076 = vpop.f32.mrb[0].mxu0
    %v1077 = vadd.f32 0.0, %v1076
    %v1078 = vpop.f32.mrb[0].mxu0
    %1079 = vdwg.mxu0
    %v1080 = vmax.f32 %v718, %v902
    %v1081 = vmax.f32 %v719, %v904
    %v1082 = vmax.f32 %v720, %v945
    %v1083 = vmax.f32 %v721, %v947
    %v1084 = vmax.f32 %v722, %v988
    %v1085 = vmax.f32 %v723, %v990
    %v1086 = vmax.f32 %v724, %v1031
    %v1087 = vmax.f32 %v725, %v1033
    %v1088 = vmax.f32 %v726, %v1074
    %v1089 = vmax.f32 %v727, %v906
    %v1090 = vmax.f32 %v728, %v908
    %v1091 = vmax.f32 %v729, %v949
    %v1092 = vmax.f32 %v730, %v951
    %v1093 = vmax.f32 %v731, %v992
    %v1094 = vmax.f32 %v732, %v994
    %v1095 = vmax.f32 %v733, %v1035
    %v1096 = vmax.f32 %v734, %v1037
    %v1097 = vmax.f32 %v735, %v1077
    %s1098 = scalar_lea.vmem %s0, 432
    %v1099 = vld [vmem:[%s1098] sm:$0xff]
    %v1100 = vld [vmem:[%s1098 + $0x8] sm:$0xff]
    %v1101 = vld [vmem:[%s1098 + $0x10] sm:$0xff]
    %v1102 = vld [vmem:[%s1098 + $0x18] sm:$0xff]
    %v1103 = vld [vmem:[%s1098 + $0x20] sm:$0xf]
    %v1104 = vld [vmem:[%s1098 + $0x24] sm:$0xff]
    %v1105 = vld [vmem:[%s1098 + $0x2c] sm:$0xff]
    %v1106 = vld [vmem:[%s1098 + $0x34] sm:$0xff]
    %v1107 = vld [vmem:[%s1098 + $0x3c] sm:$0xff]
    %v1108 = vld [vmem:[%s1098 + $0x44] sm:$0xf]
    %v1109 = vld [vmem:[%s1098 + $0x48] sm:$0xff]
    %v1110 = vld [vmem:[%s1098 + $0x50] sm:$0xff]
    %v1111 = vld [vmem:[%s1098 + $0x58] sm:$0xff]
    %v1112 = vld [vmem:[%s1098 + $0x60] sm:$0xff]
    %v1113 = vld [vmem:[%s1098 + $0x68] sm:$0xf]
    %v1114 = vld [vmem:[%s1098 + $0x6c] sm:$0x11]
    %v1115 = vld [vmem:[%s1098 + $0x74] sm:$0x11]
    %v1116 = vld [vmem:[%s1098 + $0x7c] sm:$0x11]
    %v1117 = vld [vmem:[%s1098 + $0x84] sm:$0x11]
    %v1118 = vld [vmem:[%s1098 + $0x8c] sm:$0x1]
    %v1139 = vunpack.c.l.b16 %v1099
    %v1140 = vunpack.c.h.b16 %v1099
    %v1141 = vunpack.c.l.b16 %v1100
    %v1142 = vunpack.c.h.b16 %v1100
    %v1143 = vunpack.c.l.b16 %v1101
    %v1144 = vunpack.c.h.b16 %v1101
    %v1145 = vunpack.c.l.b16 %v1102
    %v1146 = vunpack.c.h.b16 %v1102
    %v1147 = vunpack.c.l.b16 %v1103
    %v1148 = vunpack.c.l.b16 %v1104
    %v1149 = vunpack.c.h.b16 %v1104
    %v1150 = vunpack.c.l.b16 %v1105
    %v1151 = vunpack.c.h.b16 %v1105
    %v1152 = vunpack.c.l.b16 %v1106
    %v1153 = vunpack.c.h.b16 %v1106
    %v1154 = vunpack.c.l.b16 %v1107
    %v1155 = vunpack.c.h.b16 %v1107
    %v1156 = vunpack.c.l.b16 %v1108
    %v1157 = vunpack.c.l.b16 %v1109
    %v1158 = vunpack.c.h.b16 %v1109
    %v1159 = vunpack.c.l.b16 %v1110
    %v1160 = vunpack.c.h.b16 %v1110
    %v1161 = vunpack.c.l.b16 %v1111
    %v1162 = vunpack.c.h.b16 %v1111
    %v1163 = vunpack.c.l.b16 %v1112
    %v1164 = vunpack.c.h.b16 %v1112
    %v1165 = vunpack.c.l.b16 %v1113
    %v1166 = vunpack.c.l.b16 %v1114
    %v1167 = vunpack.c.h.b16 %v1114
    %v1168 = vunpack.c.l.b16 %v1115
    %v1169 = vunpack.c.h.b16 %v1115
    %v1170 = vunpack.c.l.b16 %v1116
    %v1171 = vunpack.c.h.b16 %v1116
    %v1172 = vunpack.c.l.b16 %v1117
    %v1173 = vunpack.c.h.b16 %v1117
    %v1174 = vunpack.c.l.b16 %v1118
    %v1175 = vpack.c.b16 %v1148, %v1139
    %v1176 = vpack.c.b16 %v1149, %v1140
    %v1177 = vpack.c.b16 %v1150, %v1141
    %v1178 = vpack.c.b16 %v1151, %v1142
    %v1179 = vpack.c.b16 %v1152, %v1143
    %v1180 = vpack.c.b16 %v1153, %v1144
    %v1181 = vpack.c.b16 %v1154, %v1145
    %v1182 = vpack.c.b16 %v1155, %v1146
    %v1183 = vpack.c.b16 %v1156, %v1147
    %v1184 = vpack.c.b16 %v1166, %v1157
    %v1185 = vpack.c.b16 %v1167, %v1158
    %v1186 = vpack.c.b16 %v1168, %v1159
    %v1187 = vpack.c.b16 %v1169, %v1160
    %v1188 = vpack.c.b16 %v1170, %v1161
    %v1189 = vpack.c.b16 %v1171, %v1162
    %v1190 = vpack.c.b16 %v1172, %v1163
    %v1191 = vpack.c.b16 %v1173, %v1164
    %v1192 = vpack.c.b16 %v1174, %v1165
    %v1203 = vand.u32 %v1184, %v133
    %v1206 = vand.u32 %v1185, %v133
    %v1209 = vand.u32 %v1186, %v133
    %v1212 = vand.u32 %v1187, %v133
    %v1215 = vand.u32 %v1188, %v133
    %v1218 = vand.u32 %v1189, %v133
    %v1221 = vand.u32 %v1190, %v133
    %v1224 = vand.u32 %v1191, %v133
    %v1227 = vand.u32 %v1192, %v133
    %1229 = vmatprep.subr.bf16.mxu0 %v1176
    %1230 = vmatpush1.bf16.msra.mxu0 %v1175
    %1231 = vmatprep.subr.bf16.mxu0 %v1206
    %1232 = vmatpush1.bf16.msra.mxu0 %v1203
    %1233 = vmatprep.subr.bf16.mxu0 0
    %1234 = vmatpush1.bf16.msra.mxu0 0
    %1235 = vmatprep.subr.bf16.mxu0 0
    %1236 = vmatpush1.bf16.msra.mxu0 0
    %1237 = vmatprep.subr.bf16.mxu0 0
    %1238 = vmatpush1.bf16.msra.mxu0 0
    %1239 = vmatprep.subr.bf16.mxu0 0
    %1240 = vmatpush1.bf16.msra.mxu0 0
    %1241 = vmatprep.subr.bf16.mxu0 0
    %1242 = vmatpush1.bf16.msra.mxu0 0
    %1243 = vmatprep.subr.bf16.mxu0 0
    %1244 = vmatpush1.bf16.msra.mxu0 0
    %1245 = vmatprep.subr.bf16.mxu0 0
    %1246 = vmatpush1.bf16.msra.mxu0 0
    %1247 = vmatprep.subr.bf16.mxu0 0
    %1248 = vmatpush1.bf16.msra.mxu0 0
    %1249 = vmatprep.subr.bf16.mxu0 0
    %1250 = vmatpush1.bf16.msra.mxu0 0
    %1251 = vmatprep.subr.bf16.mxu0 0
    %1252 = vmatpush1.bf16.msra.mxu0 0
    %1253 = vmatprep.subr.bf16.mxu0 0
    %1254 = vmatpush1.bf16.msra.mxu0 0
    %1255 = vmatprep.subr.bf16.mxu0 0
    %1256 = vmatpush1.bf16.msra.mxu0 0
    %1257 = vmatprep.subr.bf16.mxu0 0
    %1258 = vmatpush1.bf16.msra.mxu0 0
    %1259 = vmatprep.subr.bf16.mxu0 0
    %1260 = vmatpush1.bf16.msra.mxu0 0
    %1261 = vmatprep.mubr.bf16.mxu0 0
    %1262 = vmatmul.mubr.bf16.gmra.mrb[0].mxu0 %v128
    %v1263 = vpop.f32.mrb[0].mxu0
    %v1264 = vadd.f32 0.0, %v1263
    %v1265 = vpop.f32.mrb[0].mxu0
    %v1266 = vadd.f32 0.0, %v1265
    %v1267 = vpop.f32.mrb[0].mxu0
    %v1268 = vadd.f32 0.0, %v1267
    %v1269 = vpop.f32.mrb[0].mxu0
    %v1270 = vadd.f32 0.0, %v1269
    %1271 = vdwg.mxu0
    %1272 = vmatprep.subr.bf16.mxu0 %v1178
    %1273 = vmatpush1.bf16.msra.mxu0 %v1177
    %1274 = vmatprep.subr.bf16.mxu0 %v1212
    %1275 = vmatpush1.bf16.msra.mxu0 %v1209
    %1276 = vmatprep.subr.bf16.mxu0 0
    %1277 = vmatpush1.bf16.msra.mxu0 0
    %1278 = vmatprep.subr.bf16.mxu0 0
    %1279 = vmatpush1.bf16.msra.mxu0 0
    %1280 = vmatprep.subr.bf16.mxu0 0
    %1281 = vmatpush1.bf16.msra.mxu0 0
    %1282 = vmatprep.subr.bf16.mxu0 0
    %1283 = vmatpush1.bf16.msra.mxu0 0
    %1284 = vmatprep.subr.bf16.mxu0 0
    %1285 = vmatpush1.bf16.msra.mxu0 0
    %1286 = vmatprep.subr.bf16.mxu0 0
    %1287 = vmatpush1.bf16.msra.mxu0 0
    %1288 = vmatprep.subr.bf16.mxu0 0
    %1289 = vmatpush1.bf16.msra.mxu0 0
    %1290 = vmatprep.subr.bf16.mxu0 0
    %1291 = vmatpush1.bf16.msra.mxu0 0
    %1292 = vmatprep.subr.bf16.mxu0 0
    %1293 = vmatpush1.bf16.msra.mxu0 0
    %1294 = vmatprep.subr.bf16.mxu0 0
    %1295 = vmatpush1.bf16.msra.mxu0 0
    %1296 = vmatprep.subr.bf16.mxu0 0
    %1297 = vmatpush1.bf16.msra.mxu0 0
    %1298 = vmatprep.subr.bf16.mxu0 0
    %1299 = vmatpush1.bf16.msra.mxu0 0
    %1300 = vmatprep.subr.bf16.mxu0 0
    %1301 = vmatpush1.bf16.msra.mxu0 0
    %1302 = vmatprep.subr.bf16.mxu0 0
    %1303 = vmatpush1.bf16.msra.mxu0 0
    %1304 = vmatprep.mubr.bf16.mxu0 0
    %1305 = vmatmul.mubr.bf16.gmra.mrb[0].mxu0 %v128
    %v1306 = vpop.f32.mrb[0].mxu0
    %v1307 = vadd.f32 0.0, %v1306
    %v1308 = vpop.f32.mrb[0].mxu0
    %v1309 = vadd.f32 0.0, %v1308
    %v1310 = vpop.f32.mrb[0].mxu0
    %v1311 = vadd.f32 0.0, %v1310
    %v1312 = vpop.f32.mrb[0].mxu0
    %v1313 = vadd.f32 0.0, %v1312
    %1314 = vdwg.mxu0
    %1315 = vmatprep.subr.bf16.mxu0 %v1180
    %1316 = vmatpush1.bf16.msra.mxu0 %v1179
    %1317 = vmatprep.subr.bf16.mxu0 %v1218
    %1318 = vmatpush1.bf16.msra.mxu0 %v1215
    %1319 = vmatprep.subr.bf16.mxu0 0
    %1320 = vmatpush1.bf16.msra.mxu0 0
    %1321 = vmatprep.subr.bf16.mxu0 0
    %1322 = vmatpush1.bf16.msra.mxu0 0
    %1323 = vmatprep.subr.bf16.mxu0 0
    %1324 = vmatpush1.bf16.msra.mxu0 0
    %1325 = vmatprep.subr.bf16.mxu0 0
    %1326 = vmatpush1.bf16.msra.mxu0 0
    %1327 = vmatprep.subr.bf16.mxu0 0
    %1328 = vmatpush1.bf16.msra.mxu0 0
    %1329 = vmatprep.subr.bf16.mxu0 0
    %1330 = vmatpush1.bf16.msra.mxu0 0
    %1331 = vmatprep.subr.bf16.mxu0 0
    %1332 = vmatpush1.bf16.msra.mxu0 0
    %1333 = vmatprep.subr.bf16.mxu0 0
    %1334 = vmatpush1.bf16.msra.mxu0 0
    %1335 = vmatprep.subr.bf16.mxu0 0
    %1336 = vmatpush1.bf16.msra.mxu0 0
    %1337 = vmatprep.subr.bf16.mxu0 0
    %1338 = vmatpush1.bf16.msra.mxu0 0
    %1339 = vmatprep.subr.bf16.mxu0 0
    %1340 = vmatpush1.bf16.msra.mxu0 0
    %1341 = vmatprep.subr.bf16.mxu0 0
    %1342 = vmatpush1.bf16.msra.mxu0 0
    %1343 = vmatprep.subr.bf16.mxu0 0
    %1344 = vmatpush1.bf16.msra.mxu0 0
    %1345 = vmatprep.subr.bf16.mxu0 0
    %1346 = vmatpush1.bf16.msra.mxu0 0
    %1347 = vmatprep.mubr.bf16.mxu0 0
    %1348 = vmatmul.mubr.bf16.gmra.mrb[0].mxu0 %v128
    %v1349 = vpop.f32.mrb[0].mxu0
    %v1350 = vadd.f32 0.0, %v1349
    %v1351 = vpop.f32.mrb[0].mxu0
    %v1352 = vadd.f32 0.0, %v1351
    %v1353 = vpop.f32.mrb[0].mxu0
    %v1354 = vadd.f32 0.0, %v1353
    %v1355 = vpop.f32.mrb[0].mxu0
    %v1356 = vadd.f32 0.0, %v1355
    %1357 = vdwg.mxu0
    %1358 = vmatprep.subr.bf16.mxu0 %v1182
    %1359 = vmatpush1.bf16.msra.mxu0 %v1181
    %1360 = vmatprep.subr.bf16.mxu0 %v1224
    %1361 = vmatpush1.bf16.msra.mxu0 %v1221
    %1362 = vmatprep.subr.bf16.mxu0 0
    %1363 = vmatpush1.bf16.msra.mxu0 0
    %1364 = vmatprep.subr.bf16.mxu0 0
    %1365 = vmatpush1.bf16.msra.mxu0 0
    %1366 = vmatprep.subr.bf16.mxu0 0
    %1367 = vmatpush1.bf16.msra.mxu0 0
    %1368 = vmatprep.subr.bf16.mxu0 0
    %1369 = vmatpush1.bf16.msra.mxu0 0
    %1370 = vmatprep.subr.bf16.mxu0 0
    %1371 = vmatpush1.bf16.msra.mxu0 0
    %1372 = vmatprep.subr.bf16.mxu0 0
    %1373 = vmatpush1.bf16.msra.mxu0 0
    %1374 = vmatprep.subr.bf16.mxu0 0
    %1375 = vmatpush1.bf16.msra.mxu0 0
    %1376 = vmatprep.subr.bf16.mxu0 0
    %1377 = vmatpush1.bf16.msra.mxu0 0
    %1378 = vmatprep.subr.bf16.mxu0 0
    %1379 = vmatpush1.bf16.msra.mxu0 0
    %1380 = vmatprep.subr.bf16.mxu0 0
    %1381 = vmatpush1.bf16.msra.mxu0 0
    %1382 = vmatprep.subr.bf16.mxu0 0
    %1383 = vmatpush1.bf16.msra.mxu0 0
    %1384 = vmatprep.subr.bf16.mxu0 0
    %1385 = vmatpush1.bf16.msra.mxu0 0
    %1386 = vmatprep.subr.bf16.mxu0 0
    %1387 = vmatpush1.bf16.msra.mxu0 0
    %1388 = vmatprep.subr.bf16.mxu0 0
    %1389 = vmatpush1.bf16.msra.mxu0 0
    %1390 = vmatprep.mubr.bf16.mxu0 0
    %1391 = vmatmul.mubr.bf16.gmra.mrb[0].mxu0 %v128
    %v1392 = vpop.f32.mrb[0].mxu0
    %v1393 = vadd.f32 0.0, %v1392
    %v1394 = vpop.f32.mrb[0].mxu0
    %v1395 = vadd.f32 0.0, %v1394
    %v1396 = vpop.f32.mrb[0].mxu0
    %v1397 = vadd.f32 0.0, %v1396
    %v1398 = vpop.f32.mrb[0].mxu0
    %v1399 = vadd.f32 0.0, %v1398
    %1400 = vdwg.mxu0
    %1401 = vmatprep.subr.bf16.mxu0 0
    %1402 = vmatpush1.bf16.msra.mxu0 %v1183
    %1403 = vmatprep.subr.bf16.mxu0 0
    %1404 = vmatpush1.bf16.msra.mxu0 %v1227
    %1405 = vmatprep.subr.bf16.mxu0 0
    %1406 = vmatpush1.bf16.msra.mxu0 0
    %1407 = vmatprep.subr.bf16.mxu0 0
    %1408 = vmatpush1.bf16.msra.mxu0 0
    %1409 = vmatprep.subr.bf16.mxu0 0
    %1410 = vmatpush1.bf16.msra.mxu0 0
    %1411 = vmatprep.subr.bf16.mxu0 0
    %1412 = vmatpush1.bf16.msra.mxu0 0
    %1413 = vmatprep.subr.bf16.mxu0 0
    %1414 = vmatpush1.bf16.msra.mxu0 0
    %1415 = vmatprep.subr.bf16.mxu0 0
    %1416 = vmatpush1.bf16.msra.mxu0 0
    %1417 = vmatprep.subr.bf16.mxu0 0
    %1418 = vmatpush1.bf16.msra.mxu0 0
    %1419 = vmatprep.subr.bf16.mxu0 0
    %1420 = vmatpush1.bf16.msra.mxu0 0
    %1421 = vmatprep.subr.bf16.mxu0 0
    %1422 = vmatpush1.bf16.msra.mxu0 0
    %1423 = vmatprep.subr.bf16.mxu0 0
    %1424 = vmatpush1.bf16.msra.mxu0 0
    %1425 = vmatprep.subr.bf16.mxu0 0
    %1426 = vmatpush1.bf16.msra.mxu0 0
    %1427 = vmatprep.subr.bf16.mxu0 0
    %1428 = vmatpush1.bf16.msra.mxu0 0
    %1429 = vmatprep.subr.bf16.mxu0 0
    %1430 = vmatpush1.bf16.msra.mxu0 0
    %1431 = vmatprep.subr.bf16.mxu0 0
    %1432 = vmatpush1.bf16.msra.mxu0 0
    %1433 = vmatprep.mubr.bf16.mxu0 0
    %1434 = vmatmul.mubr.bf16.gmra.mrb[0].mxu0 %v128
    %v1435 = vpop.f32.mrb[0].mxu0
    %v1436 = vadd.f32 0.0, %v1435
    %v1437 = vpop.f32.mrb[0].mxu0
    %v1438 = vpop.f32.mrb[0].mxu0
    %v1439 = vadd.f32 0.0, %v1438
    %v1440 = vpop.f32.mrb[0].mxu0
    %1441 = vdwg.mxu0
    %v1442 = vmax.f32 %v1080, %v1264
    %v1443 = vmax.f32 %v1081, %v1266
    %v1444 = vmax.f32 %v1082, %v1307
    %v1445 = vmax.f32 %v1083, %v1309
    %v1446 = vmax.f32 %v1084, %v1350
    %v1447 = vmax.f32 %v1085, %v1352
    %v1448 = vmax.f32 %v1086, %v1393
    %v1449 = vmax.f32 %v1087, %v1395
    %v1450 = vmax.f32 %v1088, %v1436
    %v1451 = vmax.f32 %v1089, %v1268
    %v1452 = vmax.f32 %v1090, %v1270
    %v1453 = vmax.f32 %v1091, %v1311
    %v1454 = vmax.f32 %v1092, %v1313
    %v1455 = vmax.f32 %v1093, %v1354
    %v1456 = vmax.f32 %v1094, %v1356
    %v1457 = vmax.f32 %v1095, %v1397
    %v1458 = vmax.f32 %v1096, %v1399
    %v1459 = vmax.f32 %v1097, %v1439
    %v1460 = vld [vmem:[%s2] sm:$0xff]
    %v1461 = vld [vmem:[%s2 + $0x8] sm:$0xff]
    %1463 = vset.pattern.permute.xlu0 0
    %1464 = vperm.xlu0 %1463, %v1460
    %v1465 = vpop.permute.xlu0 %1464
    %1468 = vset.pattern.permute.xlu0 0
    %1469 = vperm.xlu0 %1468, %v1461
    %v1470 = vpop.permute.xlu0 %1469
    %v1472 = vadd.f32 %v1442, %v1465
    %v1473 = vadd.f32 %v1443, %v1465
    %v1474 = vadd.f32 %v1444, %v1465
    %v1475 = vadd.f32 %v1445, %v1465
    %v1476 = vadd.f32 %v1446, %v1465
    %v1477 = vadd.f32 %v1447, %v1465
    %v1478 = vadd.f32 %v1448, %v1465
    %v1479 = vadd.f32 %v1449, %v1465
    %v1480 = vadd.f32 %v1450, %v1465
    %v1481 = vadd.f32 %v1451, %v1470
    %v1482 = vadd.f32 %v1452, %v1470
    %v1483 = vadd.f32 %v1453, %v1470
    %v1484 = vadd.f32 %v1454, %v1470
    %v1485 = vadd.f32 %v1455, %v1470
    %v1486 = vadd.f32 %v1456, %v1470
    %v1487 = vadd.f32 %v1457, %v1470
    %v1488 = vadd.f32 %v1458, %v1470
    %v1489 = vadd.f32 %v1459, %v1470
    %v1490 = vmax.f32 %v1472, 0.0
    %v1491 = vmax.f32 %v1473, 0.0
    %v1492 = vmax.f32 %v1474, 0.0
    %v1493 = vmax.f32 %v1475, 0.0
    %v1494 = vmax.f32 %v1476, 0.0
    %v1495 = vmax.f32 %v1477, 0.0
    %v1496 = vmax.f32 %v1478, 0.0
    %v1497 = vmax.f32 %v1479, 0.0
    %v1498 = vmax.f32 %v1480, 0.0
    %v1499 = vmax.f32 %v1481, 0.0
    %v1500 = vmax.f32 %v1482, 0.0
    %v1501 = vmax.f32 %v1483, 0.0
    %v1502 = vmax.f32 %v1484, 0.0
    %v1503 = vmax.f32 %v1485, 0.0
    %v1504 = vmax.f32 %v1486, 0.0
    %v1505 = vmax.f32 %v1487, 0.0
    %v1506 = vmax.f32 %v1488, 0.0
    %v1507 = vmax.f32 %v1489, 0.0
    %1508 = vst [vmem:[#allocation2] sm:$0xff] %v1490
    %1509 = vst [vmem:[#allocation2 + $0x8] sm:$0xff] %v1491
    %1510 = vst [vmem:[#allocation2 + $0x10] sm:$0xff] %v1492
    %1511 = vst [vmem:[#allocation2 + $0x18] sm:$0xff] %v1493
    %1512 = vst [vmem:[#allocation2 + $0x20] sm:$0xff] %v1494
    %1513 = vst [vmem:[#allocation2 + $0x28] sm:$0xff] %v1495
    %1514 = vst [vmem:[#allocation2 + $0x30] sm:$0xff] %v1496
    %1515 = vst [vmem:[#allocation2 + $0x38] sm:$0xff] %v1497
    %1516 = vst [vmem:[#allocation2 + $0x40] sm:$0xff] %v1498
    %1517 = vst [vmem:[#allocation2 + $0x48] sm:$0xff] %v1499
    %1518 = vst [vmem:[#allocation2 + $0x50] sm:$0xff] %v1500
    %1519 = vst [vmem:[#allocation2 + $0x58] sm:$0xff] %v1501
    %1520 = vst [vmem:[#allocation2 + $0x60] sm:$0xff] %v1502
    %1521 = vst [vmem:[#allocation2 + $0x68] sm:$0xff] %v1503
    %1522 = vst [vmem:[#allocation2 + $0x70] sm:$0xff] %v1504
    %1523 = vst [vmem:[#allocation2 + $0x78] sm:$0xff] %v1505
    %1524 = vst [vmem:[#allocation2 + $0x80] sm:$0xff] %v1506
    %1525 = vst [vmem:[#allocation2 + $0x88] sm:$0xff] %v1507
    // Predicated region
    $region14: #{tpu_custom_call.1} parent=1 // pred_check
      _
    $region15: #{tpu_custom_call.1} parent=1 // pred_check_branch
      %1527 = sbr.rel (0) target = $region17
    $region16: #{tpu_custom_call.1} parent=1 // pred_region
      %s1529 = ssub.s32 2304, 2304
      %1530 = vsyncadd [#allocation3], %s1529
      %s1531 = sshll.u32 [#allocation2], 4
      %s1532 = int_to_ptr.vmem [resolvable:$true] %s1531
      %1537 = dma.vmem_to_hbm [thread:$0]  %s1532, 2304, %s3, [#allocation3], 1152, 1152, 72
    $region17: #{tpu_custom_call.1} parent=1 // pred_fallthru
      _
    // Predicated region
    $region18: #{tpu_custom_call.1} parent=1 // pred_check
      _
    $region19: #{tpu_custom_call.1} parent=1 // pred_check_branch
      %1539 = sbr.rel (0) target = $region21
    $region20: #{tpu_custom_call.1} parent=1 // pred_region
      %1540 = dma.done [#allocation3], 2304
    $region21: #{tpu_custom_call.1} parent=1 // pred_fallthru
      _
    %1541 = vsyncpa [#allocation3], 1

</llo_original>
